<compile_context>
chip_gen: v7x
topology: tpu7x:2x2x1
jax: 0.10.0
libtpu: 0.0.40
codegen_flags: <defaults>
</compile_context>

<pallas_src>
import jax
import jax.numpy as jnp
from jax.experimental import pallas as pl
from jax.experimental.pallas import tpu as pltpu

INPUT_SIZE = 637
H1 = 64
H2 = 32
OUTPUT_SIZE = 4


def mlp_kernel(x_ref, w1_ref, b1_ref, w2_ref, b2_ref, w3_ref, b3_ref, o_ref):
    # fc1 + relu (dropout1 is identity at inference).  K=637 is contracted
    # directly; Mosaic handles the ragged contraction internally.
    h1 = jnp.dot(x_ref[...], w1_ref[...], preferred_element_type=jnp.float32)
    h1 = jnp.maximum(h1 + b1_ref[...], 0.0)
    # fc2 + relu (dropout2 is identity at inference)
    h2 = jnp.dot(h1, w2_ref[...], preferred_element_type=jnp.float32)
    h2 = jnp.maximum(h2 + b2_ref[...], 0.0)
    # fc3
    o_ref[...] = (jnp.dot(h2, w3_ref[...], preferred_element_type=jnp.float32)
                  + b3_ref[...])
    # TODO(synk): training-mode dropout (p=0.5) would need pltpu.prng_seed +
    # pltpu.prng_random_bits masking; forward here follows eval-mode semantics.


def _const_spec(shape):
    """BlockSpec for grid-invariant weights/biases; single-buffered if supported."""
    index_map = lambda i: (0, 0)
    try:
        return pl.BlockSpec(shape, index_map, pipeline_mode=pl.Buffered(1))
    except TypeError:  # older JAX without pipeline_mode: default double buffer
        return pl.BlockSpec(shape, index_map)


def _choose_batch_tile(B, batch_tile, min_steps):
    """Rows per grid step.  Small B: one full-array block.  Larger B: at least
    `min_steps` sublane-aligned (multiple-of-8) tiles so both v7x TensorCores
    engage and the DMA pipeline has something to overlap."""
    if B <= 256:
        return B
    bt = pl.cdiv(B, max(2, min_steps))
    bt = ((bt + 7) // 8) * 8
    bt = min(bt, max(8, (batch_tile // 8) * 8))
    return max(bt, 8)


def neural_network_forward(x, params, *, use_bf16=True, batch_tile=None,
                           min_steps=4, vmem_limit_bytes=None):
    """x: (B, INPUT_SIZE) float32 or bfloat16.  Returns (B, OUTPUT_SIZE) float32.

    use_bf16: run x/w1 (the dominant HBM streams) in bf16 with f32 accumulation
        (~2x HBM traffic reduction; most valuable on v5e).  If x already arrives
        in bf16 it is consumed as-is; otherwise the cast sits directly in front
        of the pallas_call and allow_input_fusion lets XLA fuse it under jit.
    batch_tile: upper bound on rows per grid step.  Default 4096 bf16 / 2048 f32
        fits the 16 MiB scoped-VMEM default on every generation; sweep higher
        (v7x bf16: 4096-8192) -- vmem_limit_bytes is then set automatically.
    """
    w1, b1, w2, b2, w3, b3 = params
    B, F = x.shape
    assert F == INPUT_SIZE

    compute_bf16 = use_bf16 or x.dtype == jnp.bfloat16
    casted = False
    if compute_bf16:
        if x.dtype != jnp.bfloat16:
            x = x.astype(jnp.bfloat16)      # fused into the input DMA under jit
            casted = True
        if w1.dtype != jnp.bfloat16:
            w1 = w1.astype(jnp.bfloat16)
            casted = True

    if batch_tile is None:
        batch_tile = 4096 if compute_bf16 else 2048

    bt = _choose_batch_tile(B, batch_tile, min_steps)
    n_tiles = pl.cdiv(B, bt)   # final block may be partial: no host-side pad

    # Biases as (1, N) rows so they broadcast over the batch tile in-kernel.
    b1r = b1.reshape(1, H1)
    b2r = b2.reshape(1, H2)
    b3r = b3.reshape(1, OUTPUT_SIZE)

    # VMEM budget: double-buffered x/out tiles + (conservatively double-counted)
    # constants + slack.  Only set an explicit limit when the default 16 MiB
    # scoped VMEM (v5e) would not fit; cap below v7x's 64 MiB physical VMEM.
    x_tile_bytes = bt * INPUT_SIZE * jnp.dtype(x.dtype).itemsize
    out_tile_bytes = bt * OUTPUT_SIZE * 4
    const_bytes = sum(int(a.size) * jnp.dtype(a.dtype).itemsize
                      for a in (w1, b1r, w2, b2r, w3, b3r))
    needed = 2 * (x_tile_bytes + out_tile_bytes) + 2 * const_bytes + (2 << 20)
    if vmem_limit_bytes is None and needed > (16 << 20):
        vmem_limit_bytes = min(int(needed), 48 << 20)

    # Advisory cost estimate for XLA's scheduler around the custom call.
    flops = 2 * B * (INPUT_SIZE * H1 + H1 * H2 + H2 * OUTPUT_SIZE)
    bytes_accessed = (int(x.size) * x.dtype.itemsize
                      + const_bytes
                      + B * OUTPUT_SIZE * 4)
    cost = pl.CostEstimate(flops=flops, transcendentals=0,
                           bytes_accessed=bytes_accessed)

    compiler_params = pltpu.CompilerParams(
        dimension_semantics=("parallel",),   # batch axis shards across TCs (v7x)
        vmem_limit_bytes=vmem_limit_bytes,
        # Let XLA fuse the bf16 cast (the only producer of x/w1 here) into the
        # pallas_call's inputs instead of materializing a separate bf16 copy.
        allow_input_fusion=[True] * 7 if casted else None,
    )

    out = pl.pallas_call(
        mlp_kernel,
        out_shape=jax.ShapeDtypeStruct((B, OUTPUT_SIZE), jnp.float32),
        grid_spec=pltpu.PrefetchScalarGridSpec(
            num_scalar_prefetch=0,
            grid=(n_tiles,),
            in_specs=[
                pl.BlockSpec((bt, INPUT_SIZE), lambda i: (i, 0)),   # x tile (unpadded K)
                _const_spec((INPUT_SIZE, H1)),                      # w1 (whole, resident)
                _const_spec((1, H1)),                               # b1
                _const_spec((H1, H2)),                              # w2
                _const_spec((1, H2)),                               # b2
                _const_spec((H2, OUTPUT_SIZE)),                     # w3
                _const_spec((1, OUTPUT_SIZE)),                      # b3
            ],
            out_specs=pl.BlockSpec((bt, OUTPUT_SIZE), lambda i: (i, 0)),
        ),
        compiler_params=compiler_params,
        cost_estimate=cost,
    )(x, w1, b1r, w2, b2r, w3, b3r)

    return out


def init_params(key):
    """Deterministic init matching nn.Linear shapes (stored as (in, out))."""
    k1, k2, k3, k4, k5, k6 = jax.random.split(key, 6)

    def uinit(k, shape, fan_in):
        bound = 1.0 / jnp.sqrt(fan_in)
        return jax.random.uniform(k, shape, jnp.float32, -bound, bound)

    w1 = uinit(k1, (INPUT_SIZE, H1), INPUT_SIZE)
    b1 = uinit(k2, (H1,), INPUT_SIZE)
    w2 = uinit(k3, (H1, H2), H1)
    b2 = uinit(k4, (H2,), H1)
    w3 = uinit(k5, (H2, OUTPUT_SIZE), H2)
    b3 = uinit(k6, (OUTPUT_SIZE,), H2)
    return (w1, b1, w2, b2, w3, b3)


def reference_forward(x, params):
    w1, b1, w2, b2, w3, b3 = params
    h1 = jnp.maximum(x @ w1 + b1, 0.0)
    h2 = jnp.maximum(h1 @ w2 + b2, 0.0)
    return h2 @ w3 + b3


if __name__ == "__main__":
    key = jax.random.PRNGKey(0)
    kx, kp, kx2 = jax.random.split(key, 3)
    params = init_params(kp)

    # Small demo batch: single grid step, full-array blocks.
    B = 16
    x = jax.random.normal(kx, (B, INPUT_SIZE), dtype=jnp.float32)

    fwd_bf16 = jax.jit(lambda xx: neural_network_forward(xx, params))                    # default bf16 path
    fwd_f32 = jax.jit(lambda xx: neural_network_forward(xx, params, use_bf16=False))     # exact f32 path

    out = jax.block_until_ready(fwd_bf16(x))
    ref = reference_forward(x, params)
    assert out.shape == (B, OUTPUT_SIZE)
    assert jnp.allclose(out, ref, atol=2e-2, rtol=2e-2), "bf16 path mismatch vs reference"

    out32 = jax.block_until_ready(fwd_f32(x))
    assert jnp.allclose(out32, ref, atol=1e-4, rtol=1e-4), "f32 path mismatch vs reference"

    # Multi-step grid with a partial final block (no host-side pad): exercises
    # the clipped output store for the tail rows and the >=min_steps tiling.
    B2 = 1000
    x2 = jax.random.normal(kx2, (B2, INPUT_SIZE), dtype=jnp.float32)
    fwd_tiled = jax.jit(lambda xx: neural_network_forward(xx, params, batch_tile=256))
    out2 = jax.block_until_ready(fwd_tiled(x2))
    ref2 = reference_forward(x2, params)
    assert out2.shape == (B2, OUTPUT_SIZE)
    assert jnp.allclose(out2, ref2, atol=2e-2, rtol=2e-2), "tiled path mismatch vs reference"

    print("KERNEL_OK")
</pallas_src>

<mosaic_0001>
module attributes {stable_mosaic.version = 11 : i64} {
  func.func @mlp_kernel(%arg0: i32, %arg1: memref<16x637xbf16, #tpu.memory_space<vmem>>, %arg2: memref<637x64xbf16, #tpu.memory_space<vmem>>, %arg3: memref<1x64xf32, #tpu.memory_space<vmem>>, %arg4: memref<64x32xf32, #tpu.memory_space<vmem>>, %arg5: memref<1x32xf32, #tpu.memory_space<vmem>>, %arg6: memref<32x4xf32, #tpu.memory_space<vmem>>, %arg7: memref<1x4xf32, #tpu.memory_space<vmem>>, %arg8: memref<16x4xf32, #tpu.memory_space<vmem>>) attributes {dimension_semantics = [#tpu.dimension_semantics<parallel>], iteration_bounds = array<i64: 1>, scalar_prefetch = 0 : i64, scratch_operands = 0 : i64, tpu.core_type = #tpu.core_type<tc>, window_params = [{transform_indices = @transform_0, window_bounds = array<i64: 16, 637>}, {pipeline_mode = #tpu.pipeline_mode<synchronous>, transform_indices = @transform_1, window_bounds = array<i64: 637, 64>}, {pipeline_mode = #tpu.pipeline_mode<synchronous>, transform_indices = @transform_2, window_bounds = array<i64: 1, 64>}, {pipeline_mode = #tpu.pipeline_mode<synchronous>, transform_indices = @transform_3, window_bounds = array<i64: 64, 32>}, {pipeline_mode = #tpu.pipeline_mode<synchronous>, transform_indices = @transform_4, window_bounds = array<i64: 1, 32>}, {pipeline_mode = #tpu.pipeline_mode<synchronous>, transform_indices = @transform_5, window_bounds = array<i64: 32, 4>}, {pipeline_mode = #tpu.pipeline_mode<synchronous>, transform_indices = @transform_6, window_bounds = array<i64: 1, 4>}, {transform_indices = @transform_7, window_bounds = array<i64: 16, 4>}]} {
    %c0 = arith.constant 0 : index
    %c0_0 = arith.constant 0 : index
    %0 = vector.load %arg1[%c0, %c0_0] : memref<16x637xbf16, #tpu.memory_space<vmem>>, vector<16x637xbf16>
    %c0_1 = arith.constant 0 : index
    %c0_2 = arith.constant 0 : index
    %1 = vector.load %arg2[%c0_1, %c0_2] : memref<637x64xbf16, #tpu.memory_space<vmem>>, vector<637x64xbf16>
    %cst = arith.constant dense<0.000000e+00> : vector<16x64xf32>
    %2 = tpu.matmul %0, %1, %cst {dimension_numbers = #tpu.dot_dimension_numbers<[1], [0], [0], [1], [0, 0, 1, 1], [], []>} : vector<16x637xbf16>, vector<637x64xbf16>, vector<16x64xf32> -> vector<16x64xf32>
    %c0_3 = arith.constant 0 : index
    %c0_4 = arith.constant 0 : index
    %3 = vector.load %arg3[%c0_3, %c0_4] : memref<1x64xf32, #tpu.memory_space<vmem>>, vector<1x64xf32>
    %4 = vector.broadcast %3 : vector<1x64xf32> to vector<16x64xf32>
    %5 = arith.addf %2, %4 : vector<16x64xf32>
    %cst_5 = arith.constant 0.000000e+00 : f32
    %6 = vector.broadcast %cst_5 : f32 to vector<16x64xf32>
    %7 = arith.maximumf %5, %6 : vector<16x64xf32>
    %c0_6 = arith.constant 0 : index
    %c0_7 = arith.constant 0 : index
    %8 = vector.load %arg4[%c0_6, %c0_7] : memref<64x32xf32, #tpu.memory_space<vmem>>, vector<64x32xf32>
    %cst_8 = arith.constant dense<0.000000e+00> : vector<16x32xf32>
    %9 = tpu.matmul %7, %8, %cst_8 {dimension_numbers = #tpu.dot_dimension_numbers<[1], [0], [0], [1], [0, 0, 1, 1], [], []>} : vector<16x64xf32>, vector<64x32xf32>, vector<16x32xf32> -> vector<16x32xf32>
    %c0_9 = arith.constant 0 : index
    %c0_10 = arith.constant 0 : index
    %10 = vector.load %arg5[%c0_9, %c0_10] : memref<1x32xf32, #tpu.memory_space<vmem>>, vector<1x32xf32>
    %11 = vector.broadcast %10 : vector<1x32xf32> to vector<16x32xf32>
    %12 = arith.addf %9, %11 : vector<16x32xf32>
    %cst_11 = arith.constant 0.000000e+00 : f32
    %13 = vector.broadcast %cst_11 : f32 to vector<16x32xf32>
    %14 = arith.maximumf %12, %13 : vector<16x32xf32>
    %c0_12 = arith.constant 0 : index
    %c0_13 = arith.constant 0 : index
    %15 = vector.load %arg6[%c0_12, %c0_13] : memref<32x4xf32, #tpu.memory_space<vmem>>, vector<32x4xf32>
    %cst_14 = arith.constant dense<0.000000e+00> : vector<16x4xf32>
    %16 = tpu.matmul %14, %15, %cst_14 {dimension_numbers = #tpu.dot_dimension_numbers<[1], [0], [0], [1], [0, 0, 1, 1], [], []>} : vector<16x32xf32>, vector<32x4xf32>, vector<16x4xf32> -> vector<16x4xf32>
    %c0_15 = arith.constant 0 : index
    %c0_16 = arith.constant 0 : index
    %17 = vector.load %arg7[%c0_15, %c0_16] : memref<1x4xf32, #tpu.memory_space<vmem>>, vector<1x4xf32>
    %18 = vector.broadcast %17 : vector<1x4xf32> to vector<16x4xf32>
    %19 = arith.addf %16, %18 : vector<16x4xf32>
    %c0_17 = arith.constant 0 : index
    %c0_18 = arith.constant 0 : index
    %20 = vector.load %arg8[%c0_17, %c0_18] : memref<16x4xf32, #tpu.memory_space<vmem>>, vector<16x4xf32>
    tpu.vector_store %arg8[%c0_17, %c0_18], %19 {strides = array<i32>} : memref<16x4xf32, #tpu.memory_space<vmem>>, vector<16x4xf32>,
    return
  }
  func.func @transform_0(%arg0: i32) -> (i32, i32) {
    %c0_i32 = arith.constant 0 : i32
    %c0_i32_0 = arith.constant 0 : i32
    return %arg0, %c0_i32 : i32, i32
  }
  func.func @transform_1(%arg0: i32) -> (i32, i32) {
    %c0_i32 = arith.constant 0 : i32
    %c0_i32_0 = arith.constant 0 : i32
    %c0_i32_1 = arith.constant 0 : i32
    return %c0_i32, %c0_i32_0 : i32, i32
  }
  func.func @transform_2(%arg0: i32) -> (i32, i32) {
    %c0_i32 = arith.constant 0 : i32
    %c0_i32_0 = arith.constant 0 : i32
    %c0_i32_1 = arith.constant 0 : i32
    return %c0_i32, %c0_i32_0 : i32, i32
  }
  func.func @transform_3(%arg0: i32) -> (i32, i32) {
    %c0_i32 = arith.constant 0 : i32
    %c0_i32_0 = arith.constant 0 : i32
    %c0_i32_1 = arith.constant 0 : i32
    return %c0_i32, %c0_i32_0 : i32, i32
  }
  func.func @transform_4(%arg0: i32) -> (i32, i32) {
    %c0_i32 = arith.constant 0 : i32
    %c0_i32_0 = arith.constant 0 : i32
    %c0_i32_1 = arith.constant 0 : i32
    return %c0_i32, %c0_i32_0 : i32, i32
  }
  func.func @transform_5(%arg0: i32) -> (i32, i32) {
    %c0_i32 = arith.constant 0 : i32
    %c0_i32_0 = arith.constant 0 : i32
    %c0_i32_1 = arith.constant 0 : i32
    return %c0_i32, %c0_i32_0 : i32, i32
  }
  func.func @transform_6(%arg0: i32) -> (i32, i32) {
    %c0_i32 = arith.constant 0 : i32
    %c0_i32_0 = arith.constant 0 : i32
    %c0_i32_1 = arith.constant 0 : i32
    return %c0_i32, %c0_i32_0 : i32, i32
  }
  func.func @transform_7(%arg0: i32) -> (i32, i32) {
    %c0_i32 = arith.constant 0 : i32
    %c0_i32_0 = arith.constant 0 : i32
    return %arg0, %c0_i32 : i32, i32
  }
}

</mosaic_0001>

<llo_original>
// kernel: _lambda_.2
$region0: #{_lambda_.2}
  #allocation0 [shape = 'u32[]', space=smem, size = 0x4, offset = 0x4, fixed_abs, tag = 'smem constant byte address 0x4 - core index']
  #allocation1 [shape = 'u32[144,128]{1,0:T(1,128)}', space=vmem, size = 0x12000, scoped, tag = 'internal scratch']
  %s0 = inlined_call_operand.hbm [shape: bf16[637,64], index: 0, kind: input, shape index: {}]
  %s1 = inlined_call_operand.vmem [shape: f32[1,64], index: 1, kind: input, shape index: {}]
  %s2 = inlined_call_operand.hbm [shape: f32[64,32], index: 2, kind: input, shape index: {}]
  %s3 = inlined_call_operand.vmem [shape: f32[1,32], index: 3, kind: input, shape index: {}]
  %s4 = inlined_call_operand.hbm [shape: f32[32,4], index: 4, kind: input, shape index: {}]
  %s5 = inlined_call_operand.vmem [shape: f32[1,4], index: 5, kind: input, shape index: {}]
  %s6 = inlined_call_operand.hbm [shape: f32[16,637], index: 6, kind: input, shape index: {}]
  %s7 = inlined_call_operand.vmem [shape: f32[16,4], index: 7, kind: output, shape index: {}]
  %s8 = sld [smem:[#allocation0]]
  $region54: #{_lambda_.2} parent=0
    _
  %s10 = ssub.s32 1, %s8
  %s11 = scalar_select 0, %s10, %s8
  $region1: #{_lambda_.2} parent=0
    #allocation2 [shape = 'u8[40960]{0}', space=vmem, size = 0xa000, scoped, tag = 'operand span for operand 6']
    #allocation3 [shape = 's32[1]{0}', space=sflag, size = 0x4, scoped, tag = 'scoped memory for _lambda_.2']
    #allocation4 [shape = 'u8[163840]{0}', space=vmem, size = 0x28000, scoped, tag = 'input window, operand 1, single buffered']
    #allocation5 [shape = 's32[1]{0}', space=sflag, size = 0x4, scoped, tag = 'scoped memory for _lambda_.2']
    #allocation6 [shape = 'u8[32768]{0}', space=vmem, size = 0x8000, scoped, tag = 'input window, operand 3, single buffered']
    #allocation7 [shape = 'u8[16384]{0}', space=vmem, size = 0x4000, scoped, tag = 'input window, operand 5, single buffered']
    #allocation8 [shape = 's32[1]{0}', space=sflag, size = 0x4, scoped, tag = 'scoped memory for _lambda_.2']
    #allocation9 [shape = 'u8[20480]{0}', space=vmem, size = 0x5000, dematerialized = true, scoped, tag = 'FusionAdapter Buffer %fusion.1 = bf16[16,637]{1,0:T(8,128)(2,1)} fusion(%param_6.1), kind=kLoop, calls=%fused_computation.1.clone, metadata={op_name="jit(<lambda>)/convert_element_type" stack_frame_id=8}']
    %12 = vsyncpa [#allocation3], 0
    %13 = vsyncpa [#allocation5], 0
    %14 = vsyncpa [#allocation8], 0
    // Predicated region
    $region2: #{_lambda_.2} parent=1 // pred_check
      _
    $region3: #{_lambda_.2} parent=1 // pred_check_branch
      %16 = sbr.rel (0) target = $region5
    $region4: #{_lambda_.2} parent=1 // pred_region
      %s18 = ssub.s32 1280, 1280
      %19 = vsyncadd [#allocation3], %s18
      %s20 = sshll.u32 [#allocation2], 4
      %s21 = int_to_ptr.vmem [resolvable:$true] %s20
      %26 = dma.hbm_to_vmem [thread:$0]  %s6, 1280, %s21, [#allocation3], 640, 640, 40
    $region5: #{_lambda_.2} parent=1 // pred_fallthru
      _
    // Predicated region
    $region6: #{_lambda_.2} parent=1 // pred_check
      _
    $region7: #{_lambda_.2} parent=1 // pred_check_branch
      %28 = sbr.rel (0) target = $region9
    $region8: #{_lambda_.2} parent=1 // pred_region
      %s30 = ssub.s32 5120, 5120
      %31 = vsyncadd [#allocation5], %s30
      %s32 = sshll.u32 [#allocation4], 4
      %s33 = int_to_ptr.vmem [resolvable:$true] %s32
      %38 = dma.hbm_to_vmem [thread:$0]  %s0, 5120, %s33, [#allocation5], 64, 64, 4
    $region9: #{_lambda_.2} parent=1 // pred_fallthru
      _
    // Predicated region
    $region10: #{_lambda_.2} parent=1 // pred_check
      _
    $region11: #{_lambda_.2} parent=1 // pred_check_branch
      %40 = sbr.rel (0) target = $region13
    $region12: #{_lambda_.2} parent=1 // pred_region
      _
    $region13: #{_lambda_.2} parent=1 // pred_fallthru
      _
    // Predicated region
    $region14: #{_lambda_.2} parent=1 // pred_check
      _
    $region15: #{_lambda_.2} parent=1 // pred_check_branch
      %42 = sbr.rel (0) target = $region17
    $region16: #{_lambda_.2} parent=1 // pred_region
      %s44 = ssub.s32 1024, 1024
      %45 = vsyncadd [#allocation5], %s44
      %s46 = sshll.u32 [#allocation6], 4
      %s47 = int_to_ptr.vmem [resolvable:$true] %s46
      %52 = dma.hbm_to_vmem [thread:$0]  %s2, 1024, %s47, [#allocation5], 128, 128, 8
    $region17: #{_lambda_.2} parent=1 // pred_fallthru
      _
    // Predicated region
    $region18: #{_lambda_.2} parent=1 // pred_check
      _
    $region19: #{_lambda_.2} parent=1 // pred_check_branch
      %54 = sbr.rel (0) target = $region21
    $region20: #{_lambda_.2} parent=1 // pred_region
      _
    $region21: #{_lambda_.2} parent=1 // pred_fallthru
      _
    // Predicated region
    $region22: #{_lambda_.2} parent=1 // pred_check
      _
    $region23: #{_lambda_.2} parent=1 // pred_check_branch
      %56 = sbr.rel (0) target = $region25
    $region24: #{_lambda_.2} parent=1 // pred_region
      %s58 = ssub.s32 512, 512
      %59 = vsyncadd [#allocation8], %s58
      %s60 = sshll.u32 [#allocation7], 4
      %s61 = int_to_ptr.vmem [resolvable:$true] %s60
      %66 = dma.hbm_to_vmem [thread:$0]  %s4, 512, %s61, [#allocation8], 128, 128, 8
    $region25: #{_lambda_.2} parent=1 // pred_fallthru
      _
    // Predicated region
    $region26: #{_lambda_.2} parent=1 // pred_check
      _
    $region27: #{_lambda_.2} parent=1 // pred_check_branch
      %68 = sbr.rel (0) target = $region29
    $region28: #{_lambda_.2} parent=1 // pred_region
      _
    $region29: #{_lambda_.2} parent=1 // pred_fallthru
      _
    // Predicated region
    $region30: #{_lambda_.2} parent=1 // pred_check
      _
    $region31: #{_lambda_.2} parent=1 // pred_check_branch
      %70 = sbr.rel (0) target = $region33
    $region32: #{_lambda_.2} parent=1 // pred_region
      %71 = dma.done [#allocation3], 1280
    $region33: #{_lambda_.2} parent=1 // pred_fallthru
      _
    // Predicated region
    $region34: #{_lambda_.2} parent=1 // pred_check
      _
    $region35: #{_lambda_.2} parent=1 // pred_check_branch
      %73 = sbr.rel (0) target = $region37
    $region36: #{_lambda_.2} parent=1 // pred_region
      %74 = dma.done [#allocation5], 5120
    $region37: #{_lambda_.2} parent=1 // pred_fallthru
      _
    // Predicated region
    $region38: #{_lambda_.2} parent=1 // pred_check
      _
    $region39: #{_lambda_.2} parent=1 // pred_check_branch
      %76 = sbr.rel (0) target = $region41
    $region40: #{_lambda_.2} parent=1 // pred_region
      %77 = dma.done [#allocation5], 1024
    $region41: #{_lambda_.2} parent=1 // pred_fallthru
      _
    // Predicated region
    $region42: #{_lambda_.2} parent=1 // pred_check
      _
    $region43: #{_lambda_.2} parent=1 // pred_check_branch
      %79 = sbr.rel (0) target = $region45
    $region44: #{_lambda_.2} parent=1 // pred_region
      %80 = dma.done [#allocation8], 512
    $region45: #{_lambda_.2} parent=1 // pred_fallthru
      _
    %v81 = vld [vmem:[#allocation2] sm:$0xff]
    %82 = xla_tuple %v81
    %83 = xla_tuple %82
    %84 = xla_tuple %v81
    %v85 = vpack.c.bf16 0.0, %v81
    %87 = vst [vmem:[#allocation9] sm:$0xf] %v85
    %s88 = scalar_lea.vmem [#allocation2], 8
    %v89 = vld [vmem:[%s88] sm:$0xff]
    %90 = xla_tuple %v89
    %91 = xla_tuple %90
    %92 = xla_tuple %v89
    %s93 = scalar_lea.vmem [#allocation9], 4
    %v94 = vpack.c.bf16 0.0, %v89
    %96 = vst [vmem:[%s93] sm:$0xf] %v94
    %s97 = scalar_lea.vmem [#allocation2], 16
    %v98 = vld [vmem:[%s97] sm:$0xff]
    %99 = xla_tuple %v98
    %100 = xla_tuple %99
    %101 = xla_tuple %v98
    %s102 = scalar_lea.vmem [#allocation9], 8
    %v103 = vpack.c.bf16 0.0, %v98
    %105 = vst [vmem:[%s102] sm:$0xf] %v103
    %s106 = scalar_lea.vmem [#allocation2], 24
    %v107 = vld [vmem:[%s106] sm:$0xff]
    %108 = xla_tuple %v107
    %109 = xla_tuple %108
    %110 = xla_tuple %v107
    %s111 = scalar_lea.vmem [#allocation9], 12
    %v112 = vpack.c.bf16 0.0, %v107
    %114 = vst [vmem:[%s111] sm:$0xf] %v112
    %s115 = scalar_lea.vmem [#allocation2], 32
    %v116 = vld [vmem:[%s115] sm:$0xff]
    %117 = xla_tuple %v116
    %118 = xla_tuple %117
    %119 = xla_tuple %v116
    %s120 = scalar_lea.vmem [#allocation9], 16
    %v121 = vpack.c.bf16 0.0, %v116
    %123 = vst [vmem:[%s120] sm:$0xf] %v121
    %s124 = scalar_lea.vmem [#allocation2], 40
    %v125 = vld [vmem:[%s124] sm:$0xff]
    %126 = xla_tuple %v125
    %127 = xla_tuple %126
    %128 = xla_tuple %v125
    %s129 = scalar_lea.vmem [#allocation9], 20
    %v130 = vpack.c.bf16 0.0, %v125
    %132 = vst [vmem:[%s129] sm:$0xf] %v130
    %s133 = scalar_lea.vmem [#allocation2], 48
    %v134 = vld [vmem:[%s133] sm:$0xff]
    %135 = xla_tuple %v134
    %136 = xla_tuple %135
    %137 = xla_tuple %v134
    %s138 = scalar_lea.vmem [#allocation9], 24
    %v139 = vpack.c.bf16 0.0, %v134
    %141 = vst [vmem:[%s138] sm:$0xf] %v139
    %s142 = scalar_lea.vmem [#allocation2], 56
    %v143 = vld [vmem:[%s142] sm:$0xff]
    %144 = xla_tuple %v143
    %145 = xla_tuple %144
    %146 = xla_tuple %v143
    %s147 = scalar_lea.vmem [#allocation9], 28
    %v148 = vpack.c.bf16 0.0, %v143
    %150 = vst [vmem:[%s147] sm:$0xf] %v148
    %s151 = scalar_lea.vmem [#allocation2], 64
    %v152 = vld [vmem:[%s151] sm:$0xff]
    %153 = xla_tuple %v152
    %154 = xla_tuple %153
    %155 = xla_tuple %v152
    %s156 = scalar_lea.vmem [#allocation9], 32
    %v157 = vpack.c.bf16 0.0, %v152
    %159 = vst [vmem:[%s156] sm:$0xf] %v157
    %s160 = scalar_lea.vmem [#allocation2], 72
    %v161 = vld [vmem:[%s160] sm:$0xff]
    %162 = xla_tuple %v161
    %163 = xla_tuple %162
    %164 = xla_tuple %v161
    %s165 = scalar_lea.vmem [#allocation9], 36
    %v166 = vpack.c.bf16 0.0, %v161
    %168 = vst [vmem:[%s165] sm:$0xf] %v166
    %v170 = vld [vmem:[#allocation9] sm:$0xff]
    %v171 = vld [vmem:[#allocation9 + $0x8] sm:$0xff]
    %v172 = vld [vmem:[#allocation9 + $0x10] sm:$0xf]
    %v173 = vld [vmem:[#allocation9 + $0x14] sm:$0xff]
    %v174 = vld [vmem:[#allocation9 + $0x1c] sm:$0xff]
    %v175 = vld [vmem:[#allocation9 + $0x24] sm:$0xf]
    %v176 = vld [vmem:[#allocation4] sm:$0xf]
    %v177 = vld [vmem:[#allocation4 + $0x4] sm:$0xf]
    %v178 = vld [vmem:[#allocation4 + $0x8] sm:$0xf]
    %v179 = vld [vmem:[#allocation4 + $0xc] sm:$0xf]
    %v180 = vld [vmem:[#allocation4 + $0x10] sm:$0xf]
    %v181 = vld [vmem:[#allocation4 + $0x14] sm:$0xf]
    %v182 = vld [vmem:[#allocation4 + $0x18] sm:$0xf]
    %v183 = vld [vmem:[#allocation4 + $0x1c] sm:$0xf]
    %v184 = vld [vmem:[#allocation4 + $0x20] sm:$0xf]
    %v185 = vld [vmem:[#allocation4 + $0x24] sm:$0xf]
    %v186 = vld [vmem:[#allocation4 + $0x28] sm:$0xf]
    %v187 = vld [vmem:[#allocation4 + $0x2c] sm:$0xf]
    %v188 = vld [vmem:[#allocation4 + $0x30] sm:$0xf]
    %v189 = vld [vmem:[#allocation4 + $0x34] sm:$0xf]
    %v190 = vld [vmem:[#allocation4 + $0x38] sm:$0xf]
    %v191 = vld [vmem:[#allocation4 + $0x3c] sm:$0xf]
    %v192 = vld [vmem:[#allocation4 + $0x40] sm:$0xf]
    %v193 = vld [vmem:[#allocation4 + $0x44] sm:$0xf]
    %v194 = vld [vmem:[#allocation4 + $0x48] sm:$0xf]
    %v195 = vld [vmem:[#allocation4 + $0x4c] sm:$0xf]
    %v196 = vld [vmem:[#allocation4 + $0x50] sm:$0xf]
    %v197 = vld [vmem:[#allocation4 + $0x54] sm:$0xf]
    %v198 = vld [vmem:[#allocation4 + $0x58] sm:$0xf]
    %v199 = vld [vmem:[#allocation4 + $0x5c] sm:$0xf]
    %v200 = vld [vmem:[#allocation4 + $0x60] sm:$0xf]
    %v201 = vld [vmem:[#allocation4 + $0x64] sm:$0xf]
    %v202 = vld [vmem:[#allocation4 + $0x68] sm:$0xf]
    %v203 = vld [vmem:[#allocation4 + $0x6c] sm:$0xf]
    %v204 = vld [vmem:[#allocation4 + $0x70] sm:$0xf]
    %v205 = vld [vmem:[#allocation4 + $0x74] sm:$0xf]
    %v206 = vld [vmem:[#allocation4 + $0x78] sm:$0xf]
    %v207 = vld [vmem:[#allocation4 + $0x7c] sm:$0xf]
    %v208 = vld [vmem:[#allocation4 + $0x80] sm:$0xf]
    %v209 = vld [vmem:[#allocation4 + $0x84] sm:$0xf]
    %v210 = vld [vmem:[#allocation4 + $0x88] sm:$0xf]
    %v211 = vld [vmem:[#allocation4 + $0x8c] sm:$0xf]
    %v212 = vld [vmem:[#allocation4 + $0x90] sm:$0xf]
    %v213 = vld [vmem:[#allocation4 + $0x94] sm:$0xf]
    %v214 = vld [vmem:[#allocation4 + $0x98] sm:$0xf]
    %v215 = vld [vmem:[#allocation4 + $0x9c] sm:$0xf]
    %v216 = vld [vmem:[#allocation4 + $0xa0] sm:$0xf]
    %v217 = vld [vmem:[#allocation4 + $0xa4] sm:$0xf]
    %v218 = vld [vmem:[#allocation4 + $0xa8] sm:$0xf]
    %v219 = vld [vmem:[#allocation4 + $0xac] sm:$0xf]
    %v220 = vld [vmem:[#allocation4 + $0xb0] sm:$0xf]
    %v221 = vld [vmem:[#allocation4 + $0xb4] sm:$0xf]
    %v222 = vld [vmem:[#allocation4 + $0xb8] sm:$0xf]
    %v223 = vld [vmem:[#allocation4 + $0xbc] sm:$0xf]
    %v224 = vld [vmem:[#allocation4 + $0xc0] sm:$0xf]
    %v225 = vld [vmem:[#allocation4 + $0xc4] sm:$0xf]
    %v226 = vld [vmem:[#allocation4 + $0xc8] sm:$0xf]
    %v227 = vld [vmem:[#allocation4 + $0xcc] sm:$0xf]
    %v228 = vld [vmem:[#allocation4 + $0xd0] sm:$0xf]
    %v229 = vld [vmem:[#allocation4 + $0xd4] sm:$0xf]
    %v230 = vld [vmem:[#allocation4 + $0xd8] sm:$0xf]
    %v231 = vld [vmem:[#allocation4 + $0xdc] sm:$0xf]
    %v232 = vld [vmem:[#allocation4 + $0xe0] sm:$0xf]
    %v233 = vld [vmem:[#allocation4 + $0xe4] sm:$0xf]
    %v234 = vld [vmem:[#allocation4 + $0xe8] sm:$0xf]
    %v235 = vld [vmem:[#allocation4 + $0xec] sm:$0xf]
    %v236 = vld [vmem:[#allocation4 + $0xf0] sm:$0xf]
    %v237 = vld [vmem:[#allocation4 + $0xf4] sm:$0xf]
    %v238 = vld [vmem:[#allocation4 + $0xf8] sm:$0xf]
    %v239 = vld [vmem:[#allocation4 + $0xfc] sm:$0xf]
    %v240 = vld [vmem:[#allocation4 + $0x100] sm:$0xf]
    %v241 = vld [vmem:[#allocation4 + $0x104] sm:$0xf]
    %v242 = vld [vmem:[#allocation4 + $0x108] sm:$0xf]
    %v243 = vld [vmem:[#allocation4 + $0x10c] sm:$0xf]
    %v244 = vld [vmem:[#allocation4 + $0x110] sm:$0xf]
    %v245 = vld [vmem:[#allocation4 + $0x114] sm:$0xf]
    %v246 = vld [vmem:[#allocation4 + $0x118] sm:$0xf]
    %v247 = vld [vmem:[#allocation4 + $0x11c] sm:$0xf]
    %v248 = vld [vmem:[#allocation4 + $0x120] sm:$0xf]
    %v249 = vld [vmem:[#allocation4 + $0x124] sm:$0xf]
    %v250 = vld [vmem:[#allocation4 + $0x128] sm:$0xf]
    %v251 = vld [vmem:[#allocation4 + $0x12c] sm:$0xf]
    %v252 = vld [vmem:[#allocation4 + $0x130] sm:$0xf]
    %v253 = vld [vmem:[#allocation4 + $0x134] sm:$0xf]
    %v254 = vld [vmem:[#allocation4 + $0x138] sm:$0xf]
    %v255 = vld [vmem:[#allocation4 + $0x13c] sm:$0x7]
    %v256 = vld [vmem:[%s1] sm:$0x1]
    %v258 = vlaneseq
    %v259 = vshrl.u32 %v258, 7
    %v260 = vsub.s32 0, %v259
    %v261 = vrot.slane %v256, %v260
    %v269 = vunpack.c.l.b16 %v170
    %v270 = vunpack.c.h.b16 %v170
    %v271 = vunpack.c.l.b16 %v171
    %v272 = vunpack.c.h.b16 %v171
    %v273 = vunpack.c.l.b16 %v172
    %v274 = vunpack.c.l.b16 %v173
    %v275 = vunpack.c.h.b16 %v173
    %v276 = vunpack.c.l.b16 %v174
    %v277 = vunpack.c.h.b16 %v174
    %v278 = vunpack.c.l.b16 %v175
    %v279 = vpack.c.b16 %v274, %v269
    %v280 = vpack.c.b16 %v275, %v270
    %v281 = vpack.c.b16 %v276, %v271
    %v282 = vpack.c.b16 %v277, %v272
    %v283 = vpack.c.b16 %v278, %v273
    %v368 = vunpack.c.l.b16 %v176
    %v369 = vunpack.c.l.b16 %v177
    %v370 = vunpack.c.l.b16 %v178
    %v371 = vunpack.c.l.b16 %v179
    %v372 = vunpack.c.l.b16 %v180
    %v373 = vunpack.c.l.b16 %v181
    %v374 = vunpack.c.l.b16 %v182
    %v375 = vunpack.c.l.b16 %v183
    %v376 = vunpack.c.l.b16 %v184
    %v377 = vunpack.c.l.b16 %v185
    %v378 = vunpack.c.l.b16 %v186
    %v379 = vunpack.c.l.b16 %v187
    %v380 = vunpack.c.l.b16 %v188
    %v381 = vunpack.c.l.b16 %v189
    %v382 = vunpack.c.l.b16 %v190
    %v383 = vunpack.c.l.b16 %v191
    %v384 = vunpack.c.l.b16 %v192
    %v385 = vunpack.c.l.b16 %v193
    %v386 = vunpack.c.l.b16 %v194
    %v387 = vunpack.c.l.b16 %v195
    %v388 = vunpack.c.l.b16 %v196
    %v389 = vunpack.c.l.b16 %v197
    %v390 = vunpack.c.l.b16 %v198
    %v391 = vunpack.c.l.b16 %v199
    %v392 = vunpack.c.l.b16 %v200
    %v393 = vunpack.c.l.b16 %v201
    %v394 = vunpack.c.l.b16 %v202
    %v395 = vunpack.c.l.b16 %v203
    %v396 = vunpack.c.l.b16 %v204
    %v397 = vunpack.c.l.b16 %v205
    %v398 = vunpack.c.l.b16 %v206
    %v399 = vunpack.c.l.b16 %v207
    %v400 = vunpack.c.l.b16 %v208
    %v401 = vunpack.c.l.b16 %v209
    %v402 = vunpack.c.l.b16 %v210
    %v403 = vunpack.c.l.b16 %v211
    %v404 = vunpack.c.l.b16 %v212
    %v405 = vunpack.c.l.b16 %v213
    %v406 = vunpack.c.l.b16 %v214
    %v407 = vunpack.c.l.b16 %v215
    %v408 = vunpack.c.l.b16 %v216
    %v409 = vunpack.c.l.b16 %v217
    %v410 = vunpack.c.l.b16 %v218
    %v411 = vunpack.c.l.b16 %v219
    %v412 = vunpack.c.l.b16 %v220
    %v413 = vunpack.c.l.b16 %v221
    %v414 = vunpack.c.l.b16 %v222
    %v415 = vunpack.c.l.b16 %v223
    %v416 = vunpack.c.l.b16 %v224
    %v417 = vunpack.c.l.b16 %v225
    %v418 = vunpack.c.l.b16 %v226
    %v419 = vunpack.c.l.b16 %v227
    %v420 = vunpack.c.l.b16 %v228
    %v421 = vunpack.c.l.b16 %v229
    %v422 = vunpack.c.l.b16 %v230
    %v423 = vunpack.c.l.b16 %v231
    %v424 = vunpack.c.l.b16 %v232
    %v425 = vunpack.c.l.b16 %v233
    %v426 = vunpack.c.l.b16 %v234
    %v427 = vunpack.c.l.b16 %v235
    %v428 = vunpack.c.l.b16 %v236
    %v429 = vunpack.c.l.b16 %v237
    %v430 = vunpack.c.l.b16 %v238
    %v431 = vunpack.c.l.b16 %v239
    %v432 = vunpack.c.l.b16 %v240
    %v433 = vunpack.c.l.b16 %v241
    %v434 = vunpack.c.l.b16 %v242
    %v435 = vunpack.c.l.b16 %v243
    %v436 = vunpack.c.l.b16 %v244
    %v437 = vunpack.c.l.b16 %v245
    %v438 = vunpack.c.l.b16 %v246
    %v439 = vunpack.c.l.b16 %v247
    %v440 = vunpack.c.l.b16 %v248
    %v441 = vunpack.c.l.b16 %v249
    %v442 = vunpack.c.l.b16 %v250
    %v443 = vunpack.c.l.b16 %v251
    %v444 = vunpack.c.l.b16 %v252
    %v445 = vunpack.c.l.b16 %v253
    %v446 = vunpack.c.l.b16 %v254
    %v447 = vunpack.c.l.b16 %v255
    %v448 = vpack.c.b16 %v369, %v368
    %v449 = vpack.c.b16 %v371, %v370
    %v450 = vpack.c.b16 %v373, %v372
    %v451 = vpack.c.b16 %v375, %v374
    %v452 = vpack.c.b16 %v377, %v376
    %v453 = vpack.c.b16 %v379, %v378
    %v454 = vpack.c.b16 %v381, %v380
    %v455 = vpack.c.b16 %v383, %v382
    %v456 = vpack.c.b16 %v385, %v384
    %v457 = vpack.c.b16 %v387, %v386
    %v458 = vpack.c.b16 %v389, %v388
    %v459 = vpack.c.b16 %v391, %v390
    %v460 = vpack.c.b16 %v393, %v392
    %v461 = vpack.c.b16 %v395, %v394
    %v462 = vpack.c.b16 %v397, %v396
    %v463 = vpack.c.b16 %v399, %v398
    %v464 = vpack.c.b16 %v401, %v400
    %v465 = vpack.c.b16 %v403, %v402
    %v466 = vpack.c.b16 %v405, %v404
    %v467 = vpack.c.b16 %v407, %v406
    %v468 = vpack.c.b16 %v409, %v408
    %v469 = vpack.c.b16 %v411, %v410
    %v470 = vpack.c.b16 %v413, %v412
    %v471 = vpack.c.b16 %v415, %v414
    %v472 = vpack.c.b16 %v417, %v416
    %v473 = vpack.c.b16 %v419, %v418
    %v474 = vpack.c.b16 %v421, %v420
    %v475 = vpack.c.b16 %v423, %v422
    %v476 = vpack.c.b16 %v425, %v424
    %v477 = vpack.c.b16 %v427, %v426
    %v478 = vpack.c.b16 %v429, %v428
    %v479 = vpack.c.b16 %v431, %v430
    %v480 = vpack.c.b16 %v433, %v432
    %v481 = vpack.c.b16 %v435, %v434
    %v482 = vpack.c.b16 %v437, %v436
    %v483 = vpack.c.b16 %v439, %v438
    %v484 = vpack.c.b16 %v441, %v440
    %v485 = vpack.c.b16 %v443, %v442
    %v486 = vpack.c.b16 %v445, %v444
    %v487 = vpack.c.b16 %v447, %v446
    %vm527 = vcmask 1022976
    %v529 = vsel %vm527, %v283, 0
    %vm531 = vcmask 1045504
    %vm532 = vcmask 1046528
    %v533 = vsel %vm531, 4294967295, 65535
    %v534 = vsel %vm532, %v533, 0
    %v536 = vand.u32 %v487, %v534
    %538 = vmatprep.subr.bf16.mxu0 0
    %539 = vmatpush1.bf16.msra.mxu0 %v448
    %540 = vmatprep.subr.bf16.mxu0 0
    %541 = vmatpush1.bf16.msra.mxu0 %v449
    %542 = vmatprep.subr.bf16.mxu0 0
    %543 = vmatpush1.bf16.msra.mxu0 %v450
    %544 = vmatprep.subr.bf16.mxu0 0
    %545 = vmatpush1.bf16.msra.mxu0 %v451
    %546 = vmatprep.subr.bf16.mxu0 0
    %547 = vmatpush1.bf16.msra.mxu0 %v452
    %548 = vmatprep.subr.bf16.mxu0 0
    %549 = vmatpush1.bf16.msra.mxu0 %v453
    %550 = vmatprep.subr.bf16.mxu0 0
    %551 = vmatpush1.bf16.msra.mxu0 %v454
    %552 = vmatprep.subr.bf16.mxu0 0
    %553 = vmatpush1.bf16.msra.mxu0 %v455
    %554 = vmatprep.subr.bf16.mxu0 0
    %555 = vmatpush1.bf16.msra.mxu0 %v456
    %556 = vmatprep.subr.bf16.mxu0 0
    %557 = vmatpush1.bf16.msra.mxu0 %v457
    %558 = vmatprep.subr.bf16.mxu0 0
    %559 = vmatpush1.bf16.msra.mxu0 %v458
    %560 = vmatprep.subr.bf16.mxu0 0
    %561 = vmatpush1.bf16.msra.mxu0 %v459
    %562 = vmatprep.subr.bf16.mxu0 0
    %563 = vmatpush1.bf16.msra.mxu0 %v460
    %564 = vmatprep.subr.bf16.mxu0 0
    %565 = vmatpush1.bf16.msra.mxu0 %v461
    %566 = vmatprep.subr.bf16.mxu0 0
    %567 = vmatpush1.bf16.msra.mxu0 %v462
    %568 = vmatprep.subr.bf16.mxu0 0
    %569 = vmatpush1.bf16.msra.mxu0 %v463
    %570 = vmatprep.mubr.bf16.mxu0 %v280
    %571 = vmatmul.mubr.bf16.gmra.mrb[0].mxu0 %v279
    %v572 = vpop.f32.mrb[0].mxu0
    %v573 = vadd.f32 %v261, %v572
    %v574 = vpop.f32.mrb[0].mxu0
    %v575 = vpop.f32.mrb[0].mxu0
    %v576 = vadd.f32 %v261, %v575
    %v577 = vpop.f32.mrb[0].mxu0
    %578 = vdwg.mxu0
    %579 = vmatprep.subr.bf16.mxu0 0
    %580 = vmatpush1.bf16.msra.mxu0 %v464
    %581 = vmatprep.subr.bf16.mxu0 0
    %582 = vmatpush1.bf16.msra.mxu0 %v465
    %583 = vmatprep.subr.bf16.mxu0 0
    %584 = vmatpush1.bf16.msra.mxu0 %v466
    %585 = vmatprep.subr.bf16.mxu0 0
    %586 = vmatpush1.bf16.msra.mxu0 %v467
    %587 = vmatprep.subr.bf16.mxu0 0
    %588 = vmatpush1.bf16.msra.mxu0 %v468
    %589 = vmatprep.subr.bf16.mxu0 0
    %590 = vmatpush1.bf16.msra.mxu0 %v469
    %591 = vmatprep.subr.bf16.mxu0 0
    %592 = vmatpush1.bf16.msra.mxu0 %v470
    %593 = vmatprep.subr.bf16.mxu0 0
    %594 = vmatpush1.bf16.msra.mxu0 %v471
    %595 = vmatprep.subr.bf16.mxu0 0
    %596 = vmatpush1.bf16.msra.mxu0 %v472
    %597 = vmatprep.subr.bf16.mxu0 0
    %598 = vmatpush1.bf16.msra.mxu0 %v473
    %599 = vmatprep.subr.bf16.mxu0 0
    %600 = vmatpush1.bf16.msra.mxu0 %v474
    %601 = vmatprep.subr.bf16.mxu0 0
    %602 = vmatpush1.bf16.msra.mxu0 %v475
    %603 = vmatprep.subr.bf16.mxu0 0
    %604 = vmatpush1.bf16.msra.mxu0 %v476
    %605 = vmatprep.subr.bf16.mxu0 0
    %606 = vmatpush1.bf16.msra.mxu0 %v477
    %607 = vmatprep.subr.bf16.mxu0 0
    %608 = vmatpush1.bf16.msra.mxu0 %v478
    %609 = vmatprep.subr.bf16.mxu0 0
    %610 = vmatpush1.bf16.msra.mxu0 %v479
    %611 = vmatprep.mubr.bf16.mxu0 %v282
    %612 = vmatmul.mubr.bf16.gmra.mrb[0].mxu0 %v281
    %v613 = vpop.f32.mrb[0].mxu0
    %v614 = vadd.f32 %v573, %v613
    %v615 = vpop.f32.mrb[0].mxu0
    %v616 = vpop.f32.mrb[0].mxu0
    %v617 = vadd.f32 %v576, %v616
    %v618 = vpop.f32.mrb[0].mxu0
    %619 = vdwg.mxu0
    %620 = vmatprep.subr.bf16.mxu0 0
    %621 = vmatpush1.bf16.msra.mxu0 %v480
    %622 = vmatprep.subr.bf16.mxu0 0
    %623 = vmatpush1.bf16.msra.mxu0 %v481
    %624 = vmatprep.subr.bf16.mxu0 0
    %625 = vmatpush1.bf16.msra.mxu0 %v482
    %626 = vmatprep.subr.bf16.mxu0 0
    %627 = vmatpush1.bf16.msra.mxu0 %v483
    %628 = vmatprep.subr.bf16.mxu0 0
    %629 = vmatpush1.bf16.msra.mxu0 %v484
    %630 = vmatprep.subr.bf16.mxu0 0
    %631 = vmatpush1.bf16.msra.mxu0 %v485
    %632 = vmatprep.subr.bf16.mxu0 0
    %633 = vmatpush1.bf16.msra.mxu0 %v486
    %634 = vmatprep.subr.bf16.mxu0 0
    %635 = vmatpush1.bf16.msra.mxu0 %v536
    %636 = vmatprep.subr.bf16.mxu0 0
    %637 = vmatpush1.bf16.msra.mxu0 0
    %638 = vmatprep.subr.bf16.mxu0 0
    %639 = vmatpush1.bf16.msra.mxu0 0
    %640 = vmatprep.subr.bf16.mxu0 0
    %641 = vmatpush1.bf16.msra.mxu0 0
    %642 = vmatprep.subr.bf16.mxu0 0
    %643 = vmatpush1.bf16.msra.mxu0 0
    %644 = vmatprep.subr.bf16.mxu0 0
    %645 = vmatpush1.bf16.msra.mxu0 0
    %646 = vmatprep.subr.bf16.mxu0 0
    %647 = vmatpush1.bf16.msra.mxu0 0
    %648 = vmatprep.subr.bf16.mxu0 0
    %649 = vmatpush1.bf16.msra.mxu0 0
    %650 = vmatprep.subr.bf16.mxu0 0
    %651 = vmatpush1.bf16.msra.mxu0 0
    %652 = vmatprep.mubr.bf16.mxu0 0
    %653 = vmatmul.mubr.bf16.gmra.mrb[0].mxu0 %v529
    %v654 = vpop.f32.mrb[0].mxu0
    %v655 = vadd.f32 %v614, %v654
    %v656 = vpop.f32.mrb[0].mxu0
    %v657 = vpop.f32.mrb[0].mxu0
    %v658 = vadd.f32 %v617, %v657
    %v659 = vpop.f32.mrb[0].mxu0
    %660 = vdwg.mxu0
    %v661 = vmax.f32 %v655, 0.0
    %v662 = vmax.f32 %v658, 0.0
    %v663 = vld [vmem:[#allocation6] sm:$0xff]
    %v664 = vld [vmem:[#allocation6 + $0x8] sm:$0xff]
    %v665 = vld [vmem:[#allocation6 + $0x10] sm:$0xff]
    %v666 = vld [vmem:[#allocation6 + $0x18] sm:$0xff]
    %v667 = vld [vmem:[#allocation6 + $0x20] sm:$0xff]
    %v668 = vld [vmem:[#allocation6 + $0x28] sm:$0xff]
    %v669 = vld [vmem:[#allocation6 + $0x30] sm:$0xff]
    %v670 = vld [vmem:[#allocation6 + $0x38] sm:$0xff]
    %v671 = vld [vmem:[%s3] sm:$0x1]
    %v673 = vlaneseq
    %v674 = vshrl.u32 %v673, 7
    %v675 = vsub.s32 0, %v674
    %v676 = vrot.slane %v671, %v675
    %vm678 = vcmask 523264
    %v680 = vsel %vm678, %v661, 0
    %v683 = vsel %vm678, %v662, 0
    %685 = vmatprep.subr.mxu0 0.0
    %686 = vmatpush1.msra.mxu0 %v663
    %687 = vmatprep.subr.mxu0 0.0
    %688 = vmatpush1.msra.mxu0 %v664
    %689 = vmatprep.subr.mxu0 0.0
    %690 = vmatpush1.msra.mxu0 %v665
    %691 = vmatprep.subr.mxu0 0.0
    %692 = vmatpush1.msra.mxu0 %v666
    %693 = vmatprep.subr.mxu0 0.0
    %694 = vmatpush1.msra.mxu0 %v667
    %695 = vmatprep.subr.mxu0 0.0
    %696 = vmatpush1.msra.mxu0 %v668
    %697 = vmatprep.subr.mxu0 0.0
    %698 = vmatpush1.msra.mxu0 %v669
    %699 = vmatprep.subr.mxu0 0.0
    %700 = vmatpush1.msra.mxu0 %v670
    %701 = vmatprep.subr.mxu0 0.0
    %702 = vmatpush1.msra.mxu0 0.0
    %703 = vmatprep.subr.mxu0 0.0
    %704 = vmatpush1.msra.mxu0 0.0
    %705 = vmatprep.subr.mxu0 0.0
    %706 = vmatpush1.msra.mxu0 0.0
    %707 = vmatprep.subr.mxu0 0.0
    %708 = vmatpush1.msra.mxu0 0.0
    %709 = vmatprep.subr.mxu0 0.0
    %710 = vmatpush1.msra.mxu0 0.0
    %711 = vmatprep.subr.mxu0 0.0
    %712 = vmatpush1.msra.mxu0 0.0
    %713 = vmatprep.subr.mxu0 0.0
    %714 = vmatpush1.msra.mxu0 0.0
    %715 = vmatprep.subr.mxu0 0.0
    %716 = vmatpush1.msra.mxu0 0.0
    %717 = vmatprep.subr.mxu0 0.0
    %718 = vmatpush1.msra.mxu0 0.0
    %719 = vmatprep.subr.mxu0 0.0
    %720 = vmatpush1.msra.mxu0 0.0
    %721 = vmatprep.subr.mxu0 0.0
    %722 = vmatpush1.msra.mxu0 0.0
    %723 = vmatprep.subr.mxu0 0.0
    %724 = vmatpush1.msra.mxu0 0.0
    %725 = vmatprep.subr.mxu0 0.0
    %726 = vmatpush1.msra.mxu0 0.0
    %727 = vmatprep.subr.mxu0 0.0
    %728 = vmatpush1.msra.mxu0 0.0
    %729 = vmatprep.subr.mxu0 0.0
    %730 = vmatpush1.msra.mxu0 0.0
    %731 = vmatprep.subr.mxu0 0.0
    %732 = vmatpush1.msra.mxu0 0.0
    %733 = vmatprep.subr.mxu0 0.0
    %734 = vmatpush1.msra.mxu0 0.0
    %735 = vmatprep.subr.mxu0 0.0
    %736 = vmatpush1.msra.mxu0 0.0
    %737 = vmatprep.subr.mxu0 0.0
    %738 = vmatpush1.msra.mxu0 0.0
    %739 = vmatprep.subr.mxu0 0.0
    %740 = vmatpush1.msra.mxu0 0.0
    %741 = vmatprep.subr.mxu0 0.0
    %742 = vmatpush1.msra.mxu0 0.0
    %743 = vmatprep.subr.mxu0 0.0
    %744 = vmatpush1.msra.mxu0 0.0
    %745 = vmatprep.subr.mxu0 0.0
    %746 = vmatpush1.msra.mxu0 0.0
    %747 = vmatprep.subr.mxu0 0.0
    %748 = vmatpush1.msra.mxu0 0.0
    %749 = vmatprep.mubr.f32.mxu0 0.0
    %750 = vmatmul.mubr.f32.gmra.mrb[0].mxu0 %v680
    %v751 = vpop.f32.mrb[0].mxu0
    %v752 = vadd.f32 %v676, %v751
    %v753 = vpop.f32.mrb[0].mxu0
    %754 = vmatprep.mubr.f32.mxu0 0.0
    %755 = vmatmul.mubr.f32.gmra.mrb[0].mxu0 %v683
    %v756 = vpop.f32.mrb[0].mxu0
    %v757 = vadd.f32 %v676, %v756
    %v758 = vpop.f32.mrb[0].mxu0
    %759 = vdwg.mxu0
    %v760 = vmax.f32 %v752, 0.0
    %v761 = vmax.f32 %v757, 0.0
    %v762 = vld [vmem:[#allocation7] sm:$0xff]
    %v763 = vld [vmem:[#allocation7 + $0x8] sm:$0xff]
    %v764 = vld [vmem:[#allocation7 + $0x10] sm:$0xff]
    %v765 = vld [vmem:[#allocation7 + $0x18] sm:$0xff]
    %v766 = vld [vmem:[%s5] sm:$0x1]
    %v768 = vlaneseq
    %v769 = vshrl.u32 %v768, 7
    %v770 = vsub.s32 0, %v769
    %v771 = vrot.slane %v766, %v770
    %vm773 = vcmask 261120
    %v775 = vsel %vm773, %v760, 0
    %v778 = vsel %vm773, %v761, 0
    %780 = vmatprep.subr.mxu0 0.0
    %781 = vmatpush1.msra.mxu0 %v762
    %782 = vmatprep.subr.mxu0 0.0
    %783 = vmatpush1.msra.mxu0 %v763
    %784 = vmatprep.subr.mxu0 0.0
    %785 = vmatpush1.msra.mxu0 %v764
    %786 = vmatprep.subr.mxu0 0.0
    %787 = vmatpush1.msra.mxu0 %v765
    %788 = vmatprep.subr.mxu0 0.0
    %789 = vmatpush1.msra.mxu0 0.0
    %790 = vmatprep.subr.mxu0 0.0
    %791 = vmatpush1.msra.mxu0 0.0
    %792 = vmatprep.subr.mxu0 0.0
    %793 = vmatpush1.msra.mxu0 0.0
    %794 = vmatprep.subr.mxu0 0.0
    %795 = vmatpush1.msra.mxu0 0.0
    %796 = vmatprep.subr.mxu0 0.0
    %797 = vmatpush1.msra.mxu0 0.0
    %798 = vmatprep.subr.mxu0 0.0
    %799 = vmatpush1.msra.mxu0 0.0
    %800 = vmatprep.subr.mxu0 0.0
    %801 = vmatpush1.msra.mxu0 0.0
    %802 = vmatprep.subr.mxu0 0.0
    %803 = vmatpush1.msra.mxu0 0.0
    %804 = vmatprep.subr.mxu0 0.0
    %805 = vmatpush1.msra.mxu0 0.0
    %806 = vmatprep.subr.mxu0 0.0
    %807 = vmatpush1.msra.mxu0 0.0
    %808 = vmatprep.subr.mxu0 0.0
    %809 = vmatpush1.msra.mxu0 0.0
    %810 = vmatprep.subr.mxu0 0.0
    %811 = vmatpush1.msra.mxu0 0.0
    %812 = vmatprep.subr.mxu0 0.0
    %813 = vmatpush1.msra.mxu0 0.0
    %814 = vmatprep.subr.mxu0 0.0
    %815 = vmatpush1.msra.mxu0 0.0
    %816 = vmatprep.subr.mxu0 0.0
    %817 = vmatpush1.msra.mxu0 0.0
    %818 = vmatprep.subr.mxu0 0.0
    %819 = vmatpush1.msra.mxu0 0.0
    %820 = vmatprep.subr.mxu0 0.0
    %821 = vmatpush1.msra.mxu0 0.0
    %822 = vmatprep.subr.mxu0 0.0
    %823 = vmatpush1.msra.mxu0 0.0
    %824 = vmatprep.subr.mxu0 0.0
    %825 = vmatpush1.msra.mxu0 0.0
    %826 = vmatprep.subr.mxu0 0.0
    %827 = vmatpush1.msra.mxu0 0.0
    %828 = vmatprep.subr.mxu0 0.0
    %829 = vmatpush1.msra.mxu0 0.0
    %830 = vmatprep.subr.mxu0 0.0
    %831 = vmatpush1.msra.mxu0 0.0
    %832 = vmatprep.subr.mxu0 0.0
    %833 = vmatpush1.msra.mxu0 0.0
    %834 = vmatprep.subr.mxu0 0.0
    %835 = vmatpush1.msra.mxu0 0.0
    %836 = vmatprep.subr.mxu0 0.0
    %837 = vmatpush1.msra.mxu0 0.0
    %838 = vmatprep.subr.mxu0 0.0
    %839 = vmatpush1.msra.mxu0 0.0
    %840 = vmatprep.subr.mxu0 0.0
    %841 = vmatpush1.msra.mxu0 0.0
    %842 = vmatprep.subr.mxu0 0.0
    %843 = vmatpush1.msra.mxu0 0.0
    %844 = vmatprep.mubr.f32.mxu0 0.0
    %845 = vmatmul.mubr.f32.gmra.mrb[0].mxu0 %v775
    %v846 = vpop.f32.mrb[0].mxu0
    %v847 = vadd.f32 %v771, %v846
    %v848 = vpop.f32.mrb[0].mxu0
    %849 = vmatprep.mubr.f32.mxu0 0.0
    %850 = vmatmul.mubr.f32.gmra.mrb[0].mxu0 %v778
    %v851 = vpop.f32.mrb[0].mxu0
    %v852 = vadd.f32 %v771, %v851
    %v853 = vpop.f32.mrb[0].mxu0
    %854 = vdwg.mxu0
    %vm855 = vcmask 31744
    %856 = vst.msk [vmem:[%s7] sm:$0xff] %vm855, %v847
    %857 = vst.msk [vmem:[%s7 + $0x8] sm:$0xff] %vm855, %v852
    // Predicated region
    $region46: #{_lambda_.2} parent=1 // pred_check
      _
    $region47: #{_lambda_.2} parent=1 // pred_check_branch
      %859 = sbr.rel (0) target = $region49
    $region48: #{_lambda_.2} parent=1 // pred_region
      _
    $region49: #{_lambda_.2} parent=1 // pred_fallthru
      _
    // Predicated region
    $region50: #{_lambda_.2} parent=1 // pred_check
      _
    $region51: #{_lambda_.2} parent=1 // pred_check_branch
      %861 = sbr.rel (0) target = $region53
    $region52: #{_lambda_.2} parent=1 // pred_region
      _
    $region53: #{_lambda_.2} parent=1 // pred_fallthru
      _
    %862 = vsyncpa [#allocation3], 1
    %863 = vsyncpa [#allocation5], 1
    %864 = vsyncpa [#allocation8], 1

</llo_original>
